<compile_context>
chip_gen: v6e
topology: v6e:2x2x1
jax: 0.10.0
libtpu: 0.0.40
codegen_flags: <defaults>
</compile_context>

<pallas_src>
import jax
import jax.numpy as jnp
from jax import lax
from jax.experimental import pallas as pl
from jax.experimental.pallas import tpu as pltpu


_LANE = 128
_F_TILE_TARGET = 2048  # multiple of 128


def _round_up(x, m):
    return ((x + m - 1) // m) * m


def _vmem_capacity_bytes():
    """Physical VMEM per TensorCore; conservative fallback if the query fails."""
    try:
        return int(pltpu.get_tpu_info().vmem_capacity_bytes)
    except Exception:
        return 64 << 20  # v7x per-TC capacity: safe lower bound for all gens


def _num_tensorcores():
    """Best-effort TensorCore count per chip; default 1 (v5e/v6e behavior)."""
    try:
        info = pltpu.get_tpu_info()
        for attr in ("num_cores", "core_count", "num_tensorcores",
                     "tensorcores_per_chip"):
            v = getattr(info, attr, None)
            if isinstance(v, int) and v > 0:
                return v
    except Exception:
        pass
    return 1


def _make_grouped_conv1x1_kernel(bt):
    # Per-batch 2-D dots: natural MXU orientation, visible short loop.
    unroll = True if bt <= 8 else 8

    def kernel(w_ref, x_ref, o_ref):
        # w_ref: (bt, out_size, in_size)
        # x_ref: (bt, in_size, f_tile)
        # o_ref: (bt, out_size, f_tile)
        def body(b, carry):
            o_ref[b] = jnp.dot(
                w_ref[b], x_ref[b], preferred_element_type=jnp.float32
            ).astype(o_ref.dtype)
            return carry

        lax.fori_loop(0, bt, body, 0, unroll=unroll)

    return kernel


def _pick_tiles(bs, in_size, out_size, feats, block_budget,
                f_tile_target, max_batch_tile):
    bytes_per_elt = 4  # f32

    def per_batch_bytes(f):
        # weight block + x block + out block per batch element
        return bytes_per_elt * (out_size * in_size + in_size * f + out_size * f)

    # Feats tile: full dim (always a legal block shape) if it fits the target,
    # otherwise a lane-aligned tile with a cdiv grid (boundary block masked).
    if feats <= f_tile_target:
        f_tile = feats
    else:
        f_tile = _round_up(f_tile_target, _LANE)

    # Shrink (lane-aligned) if even a single batch would not double-buffer
    # inside the budget (degenerate huge-feats case).
    while f_tile > _LANE and 2 * per_batch_bytes(f_tile) > block_budget:
        f_tile = _round_up(max(_LANE, f_tile // 2), _LANE)

    pbb = per_batch_bytes(f_tile)
    # Batch tile: as many batches per grid step as the double-buffered budget
    # allows (multi-MB steps amortize per-step overhead in the mem-bound regime).
    bt = max(1, min(bs, block_budget // max(1, 2 * pbb)))
    if max_batch_tile is not None:
        bt = max(1, min(bt, int(max_batch_tile)))
    return bt, f_tile, pbb


def nan_embed_weird_forward(x, weights, *, f_tile_target=_F_TILE_TARGET,
                            max_batch_tile=None):
    """x: (bs, in_size, feats) f32; weights: (N, out_size, in_size, 1), N == bs."""
    bs, in_size, feats = x.shape
    n, out_size, w_in, w_k = weights.shape
    assert n == bs and w_in == in_size and w_k == 1, "grouped conv requires N == bs"

    # Metadata-only reshape (drops the trailing length-1 conv-kernel dim).
    w = weights.reshape(n, out_size, in_size)

    vmem_cap = _vmem_capacity_bytes()
    block_budget = vmem_cap // 2  # working set budget; rest is headroom

    bt, f_tile, per_batch_bytes = _pick_tiles(
        bs, in_size, out_size, feats, block_budget, f_tile_target, max_batch_tile
    )

    grid_b = pl.cdiv(bs, bt)
    grid_f = pl.cdiv(feats, f_tile)

    # If everything fits in one grid step, optionally split so both
    # TensorCores (v7x) get work.  Prefer splitting feats (weight block stays
    # resident, stores stay lane-dense); skip entirely on 1-TC chips where the
    # grid is a serial loop and splitting is pure per-step overhead.
    if grid_b * grid_f == 1 and _num_tensorcores() >= 2:
        if feats >= 2 * _LANE:
            f_tile = _round_up((feats + 1) // 2, _LANE)
            grid_f = pl.cdiv(feats, f_tile)
        elif bs >= 2:
            bt = (bs + 1) // 2
            grid_b = pl.cdiv(bs, bt)
        per_batch_bytes = 4 * (out_size * in_size + in_size * f_tile
                               + out_size * f_tile)

    grid = (grid_b, grid_f)

    # VMEM limit: exact double-buffered working set plus margin, capped well
    # below physical capacity (tight on v7x, above the 16 MiB scoped default
    # everywhere).
    block_bytes = bt * per_batch_bytes
    vmem_limit = max(16 << 20, 2 * block_bytes + (4 << 20))
    vmem_limit = int(min(vmem_limit, (vmem_cap * 3) // 4))

    flops = 2 * bs * out_size * in_size * feats
    bytes_accessed = 4 * (
        bs * out_size * in_size + bs * in_size * feats + bs * out_size * feats
    )

    kernel = _make_grouped_conv1x1_kernel(bt)

    out = pl.pallas_call(
        kernel,
        out_shape=jax.ShapeDtypeStruct((bs, out_size, feats), jnp.float32),
        grid=grid,
        in_specs=[
            # Weights: index_map ignores the feats axis -> resident across it.
            pl.BlockSpec((bt, out_size, in_size), lambda b, f: (b, 0, 0)),
            pl.BlockSpec((bt, in_size, f_tile), lambda b, f: (b, 0, f)),
        ],
        out_specs=pl.BlockSpec((bt, out_size, f_tile), lambda b, f: (b, 0, f)),
        compiler_params=pltpu.CompilerParams(
            dimension_semantics=("parallel", "parallel"),
            vmem_limit_bytes=vmem_limit,
        ),
        cost_estimate=pl.CostEstimate(
            flops=flops, bytes_accessed=bytes_accessed, transcendentals=0
        ),
    )(w, x)
    return out  # (bs, out_size, feats)


def _reference(x, weights):
    n, out_size, in_size, _ = weights.shape
    return jnp.einsum("boi,bif->bof", weights.reshape(n, out_size, in_size), x)


if __name__ == "__main__":
    key = jax.random.PRNGKey(0)

    # --- Test 1: small, lane-aligned shapes consistent with the module -----
    N, IN_SIZE, OUT_SIZE, FEATS = 2, 8, 16, 128
    kx, kw, key = jax.random.split(key, 3)
    x1 = jax.random.normal(kx, (N, IN_SIZE, FEATS), dtype=jnp.float32)
    w1 = jax.random.normal(kw, (N, OUT_SIZE, IN_SIZE, 1), dtype=jnp.float32)

    out1 = jax.block_until_ready(nan_embed_weird_forward(x1, w1))
    ref1 = _reference(x1, w1)
    assert out1.shape == (N, OUT_SIZE, FEATS)
    assert jnp.allclose(out1, ref1, atol=1e-4, rtol=1e-4)

    # --- Test 2: exercise the cdiv boundary path on both grid axes ---------
    # (non-divisible feats and batch; tiny tiles forced via overrides)
    N2, FEATS2 = 3, 192
    kx2, kw2, key = jax.random.split(key, 3)
    x2 = jax.random.normal(kx2, (N2, IN_SIZE, FEATS2), dtype=jnp.float32)
    w2 = jax.random.normal(kw2, (N2, OUT_SIZE, IN_SIZE, 1), dtype=jnp.float32)

    out2 = jax.block_until_ready(
        nan_embed_weird_forward(x2, w2, f_tile_target=128, max_batch_tile=2)
    )
    ref2 = _reference(x2, w2)
    assert out2.shape == (N2, OUT_SIZE, FEATS2)
    assert jnp.allclose(out2, ref2, atol=1e-4, rtol=1e-4)

    print("KERNEL_OK")
</pallas_src>

<mosaic_0001>
module attributes {stable_mosaic.version = 11 : i64} {
  func.func @kernel(%arg0: i32, %arg1: i32, %arg2: memref<2x16x8xf32, #tpu.memory_space<vmem>>, %arg3: memref<2x8x128xf32, #tpu.memory_space<vmem>>, %arg4: memref<2x16x128xf32, #tpu.memory_space<vmem>>) attributes {dimension_semantics = [#tpu.dimension_semantics<parallel>, #tpu.dimension_semantics<parallel>], iteration_bounds = array<i64: 1, 1>, scalar_prefetch = 0 : i64, scratch_operands = 0 : i64, tpu.core_type = #tpu.core_type<tc>, window_params = [{transform_indices = @transform_0, window_bounds = array<i64: 2, 16, 8>}, {transform_indices = @transform_1, window_bounds = array<i64: 2, 8, 128>}, {transform_indices = @transform_2, window_bounds = array<i64: 2, 16, 128>}]} {
    %c0_i32 = arith.constant 0 : i32
    %0 = arith.index_cast %c0_i32 : i32 to index
    %c0 = arith.constant 0 : index
    %c0_0 = arith.constant 0 : index
    %1 = vector.load %arg2[%0, %c0, %c0_0] : memref<2x16x8xf32, #tpu.memory_space<vmem>>, vector<1x16x8xf32>
    %2 = vector.shape_cast %1 : vector<1x16x8xf32> to vector<16x8xf32>
    %3 = arith.index_cast %c0_i32 : i32 to index
    %c0_1 = arith.constant 0 : index
    %c0_2 = arith.constant 0 : index
    %4 = vector.load %arg3[%3, %c0_1, %c0_2] : memref<2x8x128xf32, #tpu.memory_space<vmem>>, vector<1x8x128xf32>
    %5 = vector.shape_cast %4 : vector<1x8x128xf32> to vector<8x128xf32>
    %cst = arith.constant dense<0.000000e+00> : vector<16x128xf32>
    %6 = tpu.matmul %2, %5, %cst {dimension_numbers = #tpu.dot_dimension_numbers<[1], [0], [0], [1], [0, 0, 1, 1], [], []>} : vector<16x8xf32>, vector<8x128xf32>, vector<16x128xf32> -> vector<16x128xf32>
    %7 = arith.index_cast %c0_i32 : i32 to index
    %c0_3 = arith.constant 0 : index
    %c0_4 = arith.constant 0 : index
    %8 = vector.load %arg4[%7, %c0_3, %c0_4] : memref<2x16x128xf32, #tpu.memory_space<vmem>>, vector<1x16x128xf32>
    %9 = vector.shape_cast %8 : vector<1x16x128xf32> to vector<16x128xf32>
    %10 = vector.shape_cast %6 : vector<16x128xf32> to vector<1x16x128xf32>
    tpu.vector_store %arg4[%7, %c0_3, %c0_4], %10 {strides = array<i32>} : memref<2x16x128xf32, #tpu.memory_space<vmem>>, vector<1x16x128xf32>,
    %c1_i32 = arith.constant 1 : i32
    %11 = arith.index_cast %c1_i32 : i32 to index
    %c0_5 = arith.constant 0 : index
    %c0_6 = arith.constant 0 : index
    %12 = vector.load %arg2[%11, %c0_5, %c0_6] : memref<2x16x8xf32, #tpu.memory_space<vmem>>, vector<1x16x8xf32>
    %13 = vector.shape_cast %12 : vector<1x16x8xf32> to vector<16x8xf32>
    %14 = arith.index_cast %c1_i32 : i32 to index
    %c0_7 = arith.constant 0 : index
    %c0_8 = arith.constant 0 : index
    %15 = vector.load %arg3[%14, %c0_7, %c0_8] : memref<2x8x128xf32, #tpu.memory_space<vmem>>, vector<1x8x128xf32>
    %16 = vector.shape_cast %15 : vector<1x8x128xf32> to vector<8x128xf32>
    %cst_9 = arith.constant dense<0.000000e+00> : vector<16x128xf32>
    %17 = tpu.matmul %13, %16, %cst_9 {dimension_numbers = #tpu.dot_dimension_numbers<[1], [0], [0], [1], [0, 0, 1, 1], [], []>} : vector<16x8xf32>, vector<8x128xf32>, vector<16x128xf32> -> vector<16x128xf32>
    %18 = arith.index_cast %c1_i32 : i32 to index
    %c0_10 = arith.constant 0 : index
    %c0_11 = arith.constant 0 : index
    %19 = vector.load %arg4[%18, %c0_10, %c0_11] : memref<2x16x128xf32, #tpu.memory_space<vmem>>, vector<1x16x128xf32>
    %20 = vector.shape_cast %19 : vector<1x16x128xf32> to vector<16x128xf32>
    %21 = vector.shape_cast %17 : vector<16x128xf32> to vector<1x16x128xf32>
    tpu.vector_store %arg4[%18, %c0_10, %c0_11], %21 {strides = array<i32>} : memref<2x16x128xf32, #tpu.memory_space<vmem>>, vector<1x16x128xf32>,
    %c2_i32 = arith.constant 2 : i32
    return
  }
  func.func @transform_0(%arg0: i32, %arg1: i32) -> (i32, i32, i32) {
    %c0_i32 = arith.constant 0 : i32
    %c0_i32_0 = arith.constant 0 : i32
    %c0_i32_1 = arith.constant 0 : i32
    return %arg0, %c0_i32, %c0_i32_0 : i32, i32, i32
  }
  func.func @transform_1(%arg0: i32, %arg1: i32) -> (i32, i32, i32) {
    %c0_i32 = arith.constant 0 : i32
    %c0_i32_0 = arith.constant 0 : i32
    return %arg0, %c0_i32, %arg1 : i32, i32, i32
  }
  func.func @transform_2(%arg0: i32, %arg1: i32) -> (i32, i32, i32) {
    %c0_i32 = arith.constant 0 : i32
    %c0_i32_0 = arith.constant 0 : i32
    return %arg0, %c0_i32, %arg1 : i32, i32, i32
  }
}

</mosaic_0001>

<llo_original>
// kernel: tpu_custom_call.1
$region0: #{tpu_custom_call.1}
  #allocation0 [shape = 'u32[]', space=smem, size = 0x4, offset = 0x4, fixed_abs, tag = 'smem constant byte address 0x4 - core index']
  #allocation1 [shape = 'u32[144,128]{1,0:T(1,128)}', space=vmem, size = 0x12000, scoped, tag = 'internal scratch']
  %s0 = inlined_call_operand.vmem [shape: f32[2,16,8], index: 0, kind: input, shape index: {}]
  %s1 = inlined_call_operand.vmem [shape: f32[2,8,128], index: 1, kind: input, shape index: {}]
  %s2 = inlined_call_operand.hbm [shape: f32[2,16,128], index: 2, kind: output, shape index: {}]
  %s3 = sld [smem:[#allocation0]]
  $region18: #{tpu_custom_call.1} parent=0
    _
  %s5 = ssub.s32 1, %s3
  %s6 = scalar_select 0, %s5, %s3
  $region1: #{tpu_custom_call.1} parent=0
    #allocation2 [shape = 'u8[16384]{0}', space=vmem, size = 0x4000, scoped, tag = 'output window, operand 0, single buffered']
    #allocation3 [shape = 's32[1]{0}', space=sflag, size = 0x4, scoped, tag = 'scoped memory for tpu_custom_call.1']
    %7 = vsyncpa [#allocation3], 0
    // Predicated region
    $region2: #{tpu_custom_call.1} parent=1 // pred_check
      _
    $region3: #{tpu_custom_call.1} parent=1 // pred_check_branch
      %9 = sbr.rel (0) target = $region5
    $region4: #{tpu_custom_call.1} parent=1 // pred_region
      _
    $region5: #{tpu_custom_call.1} parent=1 // pred_fallthru
      _
    // Predicated region
    $region6: #{tpu_custom_call.1} parent=1 // pred_check
      _
    $region7: #{tpu_custom_call.1} parent=1 // pred_check_branch
      %11 = sbr.rel (0) target = $region9
    $region8: #{tpu_custom_call.1} parent=1 // pred_region
      _
    $region9: #{tpu_custom_call.1} parent=1 // pred_fallthru
      _
    %v12 = vld [vmem:[%s0] sm:$0xff]
    %v13 = vld [vmem:[%s0 + $0x8] sm:$0xff]
    %v14 = vld [vmem:[%s1] sm:$0xff]
    %vm15 = vcmask 64512
    %v17 = vsel %vm15, %v12, 0
    %v20 = vsel %vm15, %v13, 0
    %22 = vmatprep.subr.mxu0 0.0
    %23 = vmatpush1.msra.mxu0 0.0
    %24 = vmatprep.subr.mxu0 0.0
    %25 = vmatpush1.msra.mxu0 0.0
    %26 = vmatprep.subr.mxu0 0.0
    %27 = vmatpush1.msra.mxu0 0.0
    %28 = vmatprep.subr.mxu0 0.0
    %29 = vmatpush1.msra.mxu0 0.0
    %30 = vmatprep.subr.mxu0 0.0
    %31 = vmatpush1.msra.mxu0 0.0
    %32 = vmatprep.subr.mxu0 0.0
    %33 = vmatpush1.msra.mxu0 0.0
    %34 = vmatprep.subr.mxu0 0.0
    %35 = vmatpush1.msra.mxu0 0.0
    %36 = vmatprep.subr.mxu0 0.0
    %37 = vmatpush1.msra.mxu0 0.0
    %38 = vmatprep.subr.mxu0 0.0
    %39 = vmatpush1.msra.mxu0 0.0
    %40 = vmatprep.subr.mxu0 0.0
    %41 = vmatpush1.msra.mxu0 0.0
    %42 = vmatprep.subr.mxu0 0.0
    %43 = vmatpush1.msra.mxu0 0.0
    %44 = vmatprep.subr.mxu0 0.0
    %45 = vmatpush1.msra.mxu0 0.0
    %46 = vmatprep.subr.mxu0 0.0
    %47 = vmatpush1.msra.mxu0 0.0
    %48 = vmatprep.subr.mxu0 0.0
    %49 = vmatpush1.msra.mxu0 0.0
    %50 = vmatprep.subr.mxu0 0.0
    %51 = vmatpush1.msra.mxu0 0.0
    %52 = vmatprep.subr.mxu0 0.0
    %53 = vmatpush1.msra.mxu0 %v14
    %54 = vmatprep.subr.mxu0 0.0
    %55 = vmatpush2.msra.mxu0 0.0
    %56 = vmatprep.subr.mxu0 0.0
    %57 = vmatpush2.msra.mxu0 0.0
    %58 = vmatprep.subr.mxu0 0.0
    %59 = vmatpush2.msra.mxu0 0.0
    %60 = vmatprep.subr.mxu0 0.0
    %61 = vmatpush2.msra.mxu0 0.0
    %62 = vmatprep.subr.mxu0 0.0
    %63 = vmatpush2.msra.mxu0 0.0
    %64 = vmatprep.subr.mxu0 0.0
    %65 = vmatpush2.msra.mxu0 0.0
    %66 = vmatprep.subr.mxu0 0.0
    %67 = vmatpush2.msra.mxu0 0.0
    %68 = vmatprep.subr.mxu0 0.0
    %69 = vmatpush2.msra.mxu0 0.0
    %70 = vmatprep.subr.mxu0 0.0
    %71 = vmatpush2.msra.mxu0 0.0
    %72 = vmatprep.subr.mxu0 0.0
    %73 = vmatpush2.msra.mxu0 0.0
    %74 = vmatprep.subr.mxu0 0.0
    %75 = vmatpush2.msra.mxu0 0.0
    %76 = vmatprep.subr.mxu0 0.0
    %77 = vmatpush2.msra.mxu0 0.0
    %78 = vmatprep.subr.mxu0 0.0
    %79 = vmatpush2.msra.mxu0 0.0
    %80 = vmatprep.subr.mxu0 0.0
    %81 = vmatpush2.msra.mxu0 0.0
    %82 = vmatprep.subr.mxu0 0.0
    %83 = vmatpush2.msra.mxu0 0.0
    %84 = vmatprep.subr.mxu0 0.0
    %85 = vmatpush2.msra.mxu0 0.0
    %86 = vmatprep.mubr.f32.mxu0 0.0
    %87 = vmatmul.mubr.f32.gmra.mxu0 %v17
    %v88 = vpop.f32.mrf.mxu0
    %v89 = vadd.f32 0.0, %v88
    %v90 = vpop.f32.mrf.mxu0
    %91 = vmatprep.mubr.f32.mxu0 0.0
    %92 = vmatmul.mubr.f32.gmra.mxu0 %v20
    %v93 = vpop.f32.mrf.mxu0
    %v94 = vadd.f32 0.0, %v93
    %v95 = vpop.f32.mrf.mxu0
    %96 = vdwg.mxu0
    %97 = vst [vmem:[#allocation2] sm:$0xff] %v89
    %98 = vst [vmem:[#allocation2 + $0x8] sm:$0xff] %v94
    %s99 = scalar_lea.vmem %s0, 16
    %v100 = vld [vmem:[%s99] sm:$0xff]
    %v101 = vld [vmem:[%s99 + $0x8] sm:$0xff]
    %s102 = scalar_lea.vmem %s1, 8
    %v103 = vld [vmem:[%s102] sm:$0xff]
    %v105 = vsel %vm15, %v100, 0
    %v108 = vsel %vm15, %v101, 0
    %110 = vmatprep.subr.mxu0 0.0
    %111 = vmatpush1.msra.mxu0 0.0
    %112 = vmatprep.subr.mxu0 0.0
    %113 = vmatpush1.msra.mxu0 0.0
    %114 = vmatprep.subr.mxu0 0.0
    %115 = vmatpush1.msra.mxu0 0.0
    %116 = vmatprep.subr.mxu0 0.0
    %117 = vmatpush1.msra.mxu0 0.0
    %118 = vmatprep.subr.mxu0 0.0
    %119 = vmatpush1.msra.mxu0 0.0
    %120 = vmatprep.subr.mxu0 0.0
    %121 = vmatpush1.msra.mxu0 0.0
    %122 = vmatprep.subr.mxu0 0.0
    %123 = vmatpush1.msra.mxu0 0.0
    %124 = vmatprep.subr.mxu0 0.0
    %125 = vmatpush1.msra.mxu0 0.0
    %126 = vmatprep.subr.mxu0 0.0
    %127 = vmatpush1.msra.mxu0 0.0
    %128 = vmatprep.subr.mxu0 0.0
    %129 = vmatpush1.msra.mxu0 0.0
    %130 = vmatprep.subr.mxu0 0.0
    %131 = vmatpush1.msra.mxu0 0.0
    %132 = vmatprep.subr.mxu0 0.0
    %133 = vmatpush1.msra.mxu0 0.0
    %134 = vmatprep.subr.mxu0 0.0
    %135 = vmatpush1.msra.mxu0 0.0
    %136 = vmatprep.subr.mxu0 0.0
    %137 = vmatpush1.msra.mxu0 0.0
    %138 = vmatprep.subr.mxu0 0.0
    %139 = vmatpush1.msra.mxu0 0.0
    %140 = vmatprep.subr.mxu0 0.0
    %141 = vmatpush1.msra.mxu0 %v103
    %142 = vmatprep.subr.mxu0 0.0
    %143 = vmatpush2.msra.mxu0 0.0
    %144 = vmatprep.subr.mxu0 0.0
    %145 = vmatpush2.msra.mxu0 0.0
    %146 = vmatprep.subr.mxu0 0.0
    %147 = vmatpush2.msra.mxu0 0.0
    %148 = vmatprep.subr.mxu0 0.0
    %149 = vmatpush2.msra.mxu0 0.0
    %150 = vmatprep.subr.mxu0 0.0
    %151 = vmatpush2.msra.mxu0 0.0
    %152 = vmatprep.subr.mxu0 0.0
    %153 = vmatpush2.msra.mxu0 0.0
    %154 = vmatprep.subr.mxu0 0.0
    %155 = vmatpush2.msra.mxu0 0.0
    %156 = vmatprep.subr.mxu0 0.0
    %157 = vmatpush2.msra.mxu0 0.0
    %158 = vmatprep.subr.mxu0 0.0
    %159 = vmatpush2.msra.mxu0 0.0
    %160 = vmatprep.subr.mxu0 0.0
    %161 = vmatpush2.msra.mxu0 0.0
    %162 = vmatprep.subr.mxu0 0.0
    %163 = vmatpush2.msra.mxu0 0.0
    %164 = vmatprep.subr.mxu0 0.0
    %165 = vmatpush2.msra.mxu0 0.0
    %166 = vmatprep.subr.mxu0 0.0
    %167 = vmatpush2.msra.mxu0 0.0
    %168 = vmatprep.subr.mxu0 0.0
    %169 = vmatpush2.msra.mxu0 0.0
    %170 = vmatprep.subr.mxu0 0.0
    %171 = vmatpush2.msra.mxu0 0.0
    %172 = vmatprep.subr.mxu0 0.0
    %173 = vmatpush2.msra.mxu0 0.0
    %174 = vmatprep.mubr.f32.mxu0 0.0
    %175 = vmatmul.mubr.f32.gmra.mxu0 %v105
    %v176 = vpop.f32.mrf.mxu0
    %v177 = vadd.f32 0.0, %v176
    %v178 = vpop.f32.mrf.mxu0
    %179 = vmatprep.mubr.f32.mxu0 0.0
    %180 = vmatmul.mubr.f32.gmra.mxu0 %v108
    %v181 = vpop.f32.mrf.mxu0
    %v182 = vadd.f32 0.0, %v181
    %v183 = vpop.f32.mrf.mxu0
    %184 = vdwg.mxu0
    %s185 = scalar_lea.vmem [#allocation2], 16
    %186 = vst [vmem:[%s185] sm:$0xff] %v177
    %187 = vst [vmem:[%s185 + $0x8] sm:$0xff] %v182
    // Predicated region
    $region10: #{tpu_custom_call.1} parent=1 // pred_check
      _
    $region11: #{tpu_custom_call.1} parent=1 // pred_check_branch
      %189 = sbr.rel (0) target = $region13
    $region12: #{tpu_custom_call.1} parent=1 // pred_region
      %s191 = ssub.s32 512, 512
      %192 = vsyncadd [#allocation3], %s191
      %s193 = sshll.u32 [#allocation2], 4
      %s194 = int_to_ptr.vmem [resolvable:$true] %s193
      %199 = dma.vmem_to_hbm [thread:$0]  %s194, 512, %s2, [#allocation3], 128, 128, 8
    $region13: #{tpu_custom_call.1} parent=1 // pred_fallthru
      _
    // Predicated region
    $region14: #{tpu_custom_call.1} parent=1 // pred_check
      _
    $region15: #{tpu_custom_call.1} parent=1 // pred_check_branch
      %201 = sbr.rel (0) target = $region17
    $region16: #{tpu_custom_call.1} parent=1 // pred_region
      %202 = dma.done [#allocation3], 512
    $region17: #{tpu_custom_call.1} parent=1 // pred_fallthru
      _
    %203 = vsyncpa [#allocation3], 1

</llo_original>
